<compile_context>
chip_gen: v5e
topology: v5e:2x2
jax: 0.10.0
libtpu: 0.0.40
codegen_flags: <defaults>
</compile_context>

<pallas_src>
import functools

import jax
import jax.numpy as jnp
from jax.experimental import pallas as pl
from jax.experimental.pallas import tpu as pltpu

_LANE = 128
_SUBLANE = 8
_NEG_BIG = -1e30  # padded-class bias: exp(-1e30 - m) == 0 exactly, no inf math


def _round_up(x, m):
    return (x + m - 1) // m * m


def _vmem_budget_bytes():
    """~70% of this chip's per-core VMEM (64 MiB on v7x, 128 MiB on v5e/v6e)."""
    try:
        cap = pltpu.get_tpu_info().vmem_capacity_bytes
    except Exception:
        cap = 64 * 1024 * 1024  # conservative fallback (v7x-sized)
    return int(cap * 0.7)


def _vmem_usage_bytes(tb, d, h, cp, x_bytes, w_bytes):
    # Note: the weight specs have constant index_maps so they are DMA'd once,
    # but the pipeline still allocates two buffers for them.  (pl.Buffered(1)
    # on those specs would drop the second buffer; only matters for huge D.)
    x_buf = 2 * tb * d * x_bytes       # double-buffered x tile
    out_buf = 2 * tb * cp * 4          # double-buffered f32 output tile
    w1_buf = 2 * d * h * w_bytes
    w2_buf = 2 * h * cp * w_bytes
    tmp = tb * (h + 2 * cp) * 4        # hidden / logits / exp intermediates
    return x_buf + out_buf + w1_buf + w2_buf + tmp + (2 << 20)


def _segment_classifier_kernel(x_ref, w1_ref, b1_ref, w2_ref, b2_ref, o_ref, *,
                               compute_dtype):
    # x_ref:  (TB, D)       w1_ref: (D, H)    b1_ref: (1, H)    [H == 128]
    # w2_ref: (H, Cp)       b2_ref: (1, Cp)   o_ref:  (TB, Cp)  [Cp = round_up(C,128)]
    x = x_ref[...].astype(compute_dtype)

    # Linear 1 + ReLU (MXU, f32 accumulation).
    h = jnp.dot(x, w1_ref[...], preferred_element_type=jnp.float32) + b1_ref[...]
    h = jnp.maximum(h, 0.0)

    # Linear 2.  Padded w2 columns are 0 and padded b2 lanes are -1e30, so the
    # padded logits contribute exp(-1e30 - m) == 0 to the softmax (C >= 1 real
    # class always supplies a finite row max).
    logits = (jnp.dot(h.astype(compute_dtype), w2_ref[...],
                      preferred_element_type=jnp.float32) + b2_ref[...])

    # Numerically stable softmax; exact divide (the (TB,1) divide is invisible
    # under the HBM bound, so no reason to use the approximate reciprocal).
    m = jnp.max(logits, axis=-1, keepdims=True)
    e = jnp.exp(logits - m)
    s = jnp.sum(e, axis=-1, keepdims=True)
    o_ref[...] = (e / s).astype(o_ref.dtype)


@functools.partial(jax.jit, static_argnames=("compute_dtype",))
def segment_classifier(x, w1, b1, w2, b2, *, compute_dtype=jnp.bfloat16):
    """x: (B, num_segments, embed_dim) -> (B, num_classes) softmax probabilities."""
    B = x.shape[0]
    D = x.shape[1] * x.shape[2]
    H = w1.shape[1]                    # 128 (fixed by the module)
    C = w2.shape[1]
    Cp = _round_up(C, _LANE)           # lane-dense output -> unmasked stores

    x_bytes = jnp.dtype(x.dtype).itemsize
    w_bytes = jnp.dtype(compute_dtype).itemsize
    budget = _vmem_budget_bytes()

    # ---- batch tile --------------------------------------------------------
    if B <= 1024:
        tb = B                         # one full-batch tile: zero batch padding
    else:
        bp8 = _round_up(B, _SUBLANE)
        tb = 128
        for cand in (1024, 768, 512, 384, 256, 128):
            if _round_up(bp8, cand) - bp8 <= bp8 // 8:   # <= ~12.5% padding waste
                tb = cand
                break
    while tb > _SUBLANE and _vmem_usage_bytes(tb, D, H, Cp, x_bytes, w_bytes) > budget:
        tb = max(_SUBLANE, (tb // 2) // _SUBLANE * _SUBLANE)
    # TODO(synk): for extremely large D (>= ~8K on v7x) add a K-axis grid over D
    # with an f32 VMEM accumulator instead of shrinking the batch tile.

    Bp = B if tb == B else _round_up(B, tb)

    # ---- operands ----------------------------------------------------------
    x_flat = x.reshape(B, D)                               # nn.Flatten(): free reshape
    if Bp != B:
        x_flat = jnp.pad(x_flat, ((0, Bp - B), (0, 0)))    # batch-only pad (rare)

    w1_c = w1.astype(compute_dtype)
    b1_2d = b1.reshape(1, H).astype(jnp.float32)
    w2_pad = jnp.zeros((H, Cp), compute_dtype).at[:, :C].set(w2.astype(compute_dtype))
    b2_pad = jnp.full((1, Cp), _NEG_BIG, jnp.float32).at[0, :C].set(
        b2.astype(jnp.float32))

    grid = (Bp // tb,)
    flops = 2 * Bp * (D * H + H * Cp)
    bytes_accessed = (Bp * D * x_bytes + D * H * w_bytes + H * Cp * w_bytes
                      + 4 * (H + Cp) + 4 * Bp * Cp)
    transcendentals = Bp * Cp

    kernel = functools.partial(_segment_classifier_kernel, compute_dtype=compute_dtype)

    out_pad = pl.pallas_call(
        kernel,
        out_shape=jax.ShapeDtypeStruct((Bp, Cp), jnp.float32),
        grid_spec=pltpu.PrefetchScalarGridSpec(
            num_scalar_prefetch=0,
            grid=grid,
            in_specs=[
                pl.BlockSpec((tb, D), lambda i: (i, 0)),   # x tile (pipelined)
                pl.BlockSpec((D, H), lambda i: (0, 0)),    # w1 (VMEM-resident)
                pl.BlockSpec((1, H), lambda i: (0, 0)),    # b1 (resident)
                pl.BlockSpec((H, Cp), lambda i: (0, 0)),   # w2 (resident)
                pl.BlockSpec((1, Cp), lambda i: (0, 0)),   # b2 (resident)
            ],
            out_specs=pl.BlockSpec((tb, Cp), lambda i: (i, 0)),
        ),
        compiler_params=pltpu.CompilerParams(
            dimension_semantics=("parallel",),          # batch tiles shard across TCs
            vmem_limit_bytes=budget,                    # per-generation VMEM budget
            allow_input_fusion=[True, False, False, False, False],  # fuse x reshape/pad
        ),
        cost_estimate=pl.CostEstimate(
            flops=flops,
            transcendentals=transcendentals,
            bytes_accessed=bytes_accessed,
        ),
    )(x_flat, w1_c, b1_2d, w2_pad, b2_pad)

    return out_pad[:B, :C]


def _ref_forward(x, w1, b1, w2, b2):
    """Pure-JAX reference (mirrors the PyTorch forward)."""
    B = x.shape[0]
    x_flat = x.reshape(B, -1)
    h = jnp.maximum(x_flat @ w1 + b1, 0.0)
    logits = h @ w2 + b2
    return jax.nn.softmax(logits, axis=-1)


if __name__ == "__main__":
    embed_dim = 32
    num_segments = 8
    num_classes = 10
    batch = 2
    hidden = 128   # fixed by the module (nn.Linear(D, 128))

    key = jax.random.PRNGKey(0)
    kx, k1, k2, k3, k4 = jax.random.split(key, 5)

    x = jax.random.normal(kx, (batch, num_segments, embed_dim), dtype=jnp.float32)

    # Parameters stored (in, out) so the kernel computes y = x @ W + b
    # (identical to torch's x @ W_t.T + b).
    d_in = embed_dim * num_segments
    w1 = jax.random.normal(k1, (d_in, hidden), dtype=jnp.float32) * 0.05
    b1 = jax.random.normal(k2, (hidden,), dtype=jnp.float32) * 0.05
    w2 = jax.random.normal(k3, (hidden, num_classes), dtype=jnp.float32) * 0.05
    b2 = jax.random.normal(k4, (num_classes,), dtype=jnp.float32) * 0.05

    ref = _ref_forward(x, w1, b1, w2, b2)

    # Default bf16-streamed MXU path (kernel is HBM-bound; bf16 is the native
    # MXU input dtype on v5e/v6e/v7x).
    out_bf16 = jax.block_until_ready(segment_classifier(x, w1, b1, w2, b2))
    assert out_bf16.shape == (batch, num_classes)
    assert jnp.allclose(out_bf16, ref, atol=2e-2, rtol=2e-2)
    assert jnp.allclose(jnp.sum(out_bf16, axis=-1), jnp.ones((batch,)), atol=1e-4)

    # f32 path for tight parity with the f32 torch module.
    out_f32 = jax.block_until_ready(
        segment_classifier(x, w1, b1, w2, b2, compute_dtype=jnp.float32))
    assert out_f32.shape == (batch, num_classes)
    assert jnp.allclose(out_f32, ref, atol=2e-3, rtol=2e-3)
    assert jnp.allclose(jnp.sum(out_f32, axis=-1), jnp.ones((batch,)), atol=1e-4)

    print("KERNEL_OK")
</pallas_src>

<mosaic_0001>
module attributes {stable_mosaic.version = 11 : i64} {
  func.func @_segment_classifier_kernel(%arg0: i32, %arg1: memref<2x256xf32, #tpu.memory_space<vmem>>, %arg2: memref<256x128xbf16, #tpu.memory_space<vmem>>, %arg3: memref<1x128xf32, #tpu.memory_space<vmem>>, %arg4: memref<128x128xbf16, #tpu.memory_space<vmem>>, %arg5: memref<1x128xf32, #tpu.memory_space<vmem>>, %arg6: memref<2x128xf32, #tpu.memory_space<vmem>>) attributes {dimension_semantics = [#tpu.dimension_semantics<parallel>], iteration_bounds = array<i64: 1>, scalar_prefetch = 0 : i64, scratch_operands = 0 : i64, tpu.core_type = #tpu.core_type<tc>, window_params = [{transform_indices = @transform_0, window_bounds = array<i64: 2, 256>}, {pipeline_mode = #tpu.pipeline_mode<synchronous>, transform_indices = @transform_1, window_bounds = array<i64: 256, 128>}, {pipeline_mode = #tpu.pipeline_mode<synchronous>, transform_indices = @transform_2, window_bounds = array<i64: 1, 128>}, {pipeline_mode = #tpu.pipeline_mode<synchronous>, transform_indices = @transform_3, window_bounds = array<i64: 128, 128>}, {pipeline_mode = #tpu.pipeline_mode<synchronous>, transform_indices = @transform_4, window_bounds = array<i64: 1, 128>}, {transform_indices = @transform_5, window_bounds = array<i64: 2, 128>}]} {
    %c0 = arith.constant 0 : index
    %c0_0 = arith.constant 0 : index
    %0 = vector.load %arg1[%c0, %c0_0] : memref<2x256xf32, #tpu.memory_space<vmem>>, vector<2x256xf32>
    %1 = arith.truncf %0 : vector<2x256xf32> to vector<2x256xbf16>
    %c0_1 = arith.constant 0 : index
    %c0_2 = arith.constant 0 : index
    %2 = vector.load %arg2[%c0_1, %c0_2] : memref<256x128xbf16, #tpu.memory_space<vmem>>, vector<256x128xbf16>
    %cst = arith.constant dense<0.000000e+00> : vector<2x128xf32>
    %3 = tpu.matmul %1, %2, %cst {dimension_numbers = #tpu.dot_dimension_numbers<[1], [0], [0], [1], [0, 0, 1, 1], [], []>} : vector<2x256xbf16>, vector<256x128xbf16>, vector<2x128xf32> -> vector<2x128xf32>
    %c0_3 = arith.constant 0 : index
    %c0_4 = arith.constant 0 : index
    %4 = vector.load %arg3[%c0_3, %c0_4] : memref<1x128xf32, #tpu.memory_space<vmem>>, vector<1x128xf32>
    %5 = vector.broadcast %4 : vector<1x128xf32> to vector<2x128xf32>
    %6 = arith.addf %3, %5 : vector<2x128xf32>
    %cst_5 = arith.constant 0.000000e+00 : f32
    %7 = vector.broadcast %cst_5 : f32 to vector<2x128xf32>
    %8 = arith.maximumf %6, %7 : vector<2x128xf32>
    %9 = arith.truncf %8 : vector<2x128xf32> to vector<2x128xbf16>
    %c0_6 = arith.constant 0 : index
    %c0_7 = arith.constant 0 : index
    %10 = vector.load %arg4[%c0_6, %c0_7] : memref<128x128xbf16, #tpu.memory_space<vmem>>, vector<128x128xbf16>
    %cst_8 = arith.constant dense<0.000000e+00> : vector<2x128xf32>
    %11 = tpu.matmul %9, %10, %cst_8 {dimension_numbers = #tpu.dot_dimension_numbers<[1], [0], [0], [1], [0, 0, 1, 1], [], []>} : vector<2x128xbf16>, vector<128x128xbf16>, vector<2x128xf32> -> vector<2x128xf32>
    %c0_9 = arith.constant 0 : index
    %c0_10 = arith.constant 0 : index
    %12 = vector.load %arg5[%c0_9, %c0_10] : memref<1x128xf32, #tpu.memory_space<vmem>>, vector<1x128xf32>
    %13 = vector.broadcast %12 : vector<1x128xf32> to vector<2x128xf32>
    %14 = arith.addf %11, %13 : vector<2x128xf32>
    %cst_11 = arith.constant dense<0xFF800000> : vector<2xf32>
    %15 = vector.multi_reduction <maximumf>, %14, %cst_11 [1] : vector<2x128xf32> to vector<2xf32>
    %16 = vector.shape_cast %15 : vector<2xf32> to vector<2x1xf32>
    %17 = vector.broadcast %16 : vector<2x1xf32> to vector<2x128xf32>
    %18 = arith.subf %14, %17 : vector<2x128xf32>
    %19 = math.exp %18 : vector<2x128xf32>
    %cst_12 = arith.constant dense<0.000000e+00> : vector<2xf32>
    %20 = vector.multi_reduction <add>, %19, %cst_12 [1] : vector<2x128xf32> to vector<2xf32>
    %21 = vector.shape_cast %20 : vector<2xf32> to vector<2x1xf32>
    %22 = vector.broadcast %21 : vector<2x1xf32> to vector<2x128xf32>
    %23 = arith.divf %19, %22 : vector<2x128xf32>
    %c0_13 = arith.constant 0 : index
    %c0_14 = arith.constant 0 : index
    %24 = vector.load %arg6[%c0_13, %c0_14] : memref<2x128xf32, #tpu.memory_space<vmem>>, vector<2x128xf32>
    tpu.vector_store %arg6[%c0_13, %c0_14], %23 {strides = array<i32>} : memref<2x128xf32, #tpu.memory_space<vmem>>, vector<2x128xf32>,
    return
  }
  func.func @transform_0(%arg0: i32) -> (i32, i32) {
    %c0_i32 = arith.constant 0 : i32
    %c0_i32_0 = arith.constant 0 : i32
    return %arg0, %c0_i32 : i32, i32
  }
  func.func @transform_1(%arg0: i32) -> (i32, i32) {
    %c0_i32 = arith.constant 0 : i32
    %c0_i32_0 = arith.constant 0 : i32
    %c0_i32_1 = arith.constant 0 : i32
    return %c0_i32, %c0_i32_0 : i32, i32
  }
  func.func @transform_2(%arg0: i32) -> (i32, i32) {
    %c0_i32 = arith.constant 0 : i32
    %c0_i32_0 = arith.constant 0 : i32
    %c0_i32_1 = arith.constant 0 : i32
    return %c0_i32, %c0_i32_0 : i32, i32
  }
  func.func @transform_3(%arg0: i32) -> (i32, i32) {
    %c0_i32 = arith.constant 0 : i32
    %c0_i32_0 = arith.constant 0 : i32
    %c0_i32_1 = arith.constant 0 : i32
    return %c0_i32, %c0_i32_0 : i32, i32
  }
  func.func @transform_4(%arg0: i32) -> (i32, i32) {
    %c0_i32 = arith.constant 0 : i32
    %c0_i32_0 = arith.constant 0 : i32
    %c0_i32_1 = arith.constant 0 : i32
    return %c0_i32, %c0_i32_0 : i32, i32
  }
  func.func @transform_5(%arg0: i32) -> (i32, i32) {
    %c0_i32 = arith.constant 0 : i32
    %c0_i32_0 = arith.constant 0 : i32
    return %arg0, %c0_i32 : i32, i32
  }
}

</mosaic_0001>

<llo_original>
// kernel: segment_classifier.1
$region0: #{segment_classifier.1}
  #allocation0 [shape = 'u32[]', space=smem, size = 0x4, offset = 0x4, fixed_abs, tag = 'smem constant byte address 0x4 - core index']
  #allocation1 [shape = 'u32[72,128]{1,0:T(1,128)}', space=vmem, size = 0x9000, scoped, tag = 'internal scratch']
  %s0 = inlined_call_operand.vmem [shape: f32[2,256], index: 0, kind: input, shape index: {}]
  %s1 = inlined_call_operand.vmem [shape: bf16[256,128], index: 1, kind: input, shape index: {}]
  %s2 = inlined_call_operand.vmem [shape: f32[1,128], index: 2, kind: input, shape index: {}]
  %s3 = inlined_call_operand.vmem [shape: bf16[128,128], index: 3, kind: input, shape index: {}]
  %s4 = inlined_call_operand.vmem [shape: f32[1,128], index: 4, kind: input, shape index: {}]
  %s5 = inlined_call_operand.hbm [shape: f32[2,128], index: 5, kind: output, shape index: {}]
  %s6 = sld [smem:[#allocation0]]
  $region30: #{segment_classifier.1} parent=0
    _
  %s8 = ssub.s32 1, %s6
  %s9 = scalar_select 0, %s8, %s6
  $region1: #{segment_classifier.1} parent=0
    #allocation2 [shape = 'u8[1024]{0}', space=vmem, size = 0x400, scoped, tag = 'output window, operand 0, single buffered']
    #allocation3 [shape = 's32[1]{0}', space=sflag, size = 0x4, scoped, tag = 'scoped memory for segment_classifier.1']
    %10 = vsyncpa [#allocation3], 0
    // Predicated region
    $region2: #{segment_classifier.1} parent=1 // pred_check
      _
    $region3: #{segment_classifier.1} parent=1 // pred_check_branch
      %12 = sbr.rel (0) target = $region5
    $region4: #{segment_classifier.1} parent=1 // pred_region
      _
    $region5: #{segment_classifier.1} parent=1 // pred_fallthru
      _
    // Predicated region
    $region6: #{segment_classifier.1} parent=1 // pred_check
      _
    $region7: #{segment_classifier.1} parent=1 // pred_check_branch
      %14 = sbr.rel (0) target = $region9
    $region8: #{segment_classifier.1} parent=1 // pred_region
      _
    $region9: #{segment_classifier.1} parent=1 // pred_fallthru
      _
    // Predicated region
    $region10: #{segment_classifier.1} parent=1 // pred_check
      _
    $region11: #{segment_classifier.1} parent=1 // pred_check_branch
      %16 = sbr.rel (0) target = $region13
    $region12: #{segment_classifier.1} parent=1 // pred_region
      _
    $region13: #{segment_classifier.1} parent=1 // pred_fallthru
      _
    // Predicated region
    $region14: #{segment_classifier.1} parent=1 // pred_check
      _
    $region15: #{segment_classifier.1} parent=1 // pred_check_branch
      %18 = sbr.rel (0) target = $region17
    $region16: #{segment_classifier.1} parent=1 // pred_region
      _
    $region17: #{segment_classifier.1} parent=1 // pred_fallthru
      _
    // Predicated region
    $region18: #{segment_classifier.1} parent=1 // pred_check
      _
    $region19: #{segment_classifier.1} parent=1 // pred_check_branch
      %20 = sbr.rel (0) target = $region21
    $region20: #{segment_classifier.1} parent=1 // pred_region
      _
    $region21: #{segment_classifier.1} parent=1 // pred_fallthru
      _
    %v21 = vld [vmem:[%s0] sm:$0xf]
    %23 = vst [vmem:[#allocation1] ss:$4 sm:$0xff] %v21
    %v24 = vld.sshfl [vmem:[#allocation1] sm:$0xff pattern:$0x73625140]
    %v25 = vld.sshfl [vmem:[#allocation1 + $0x8] sm:$0xff pattern:$0x73625140]
    %v28 = vpack.c.bf16 %v24, %v24
    %v29 = vpack.c.bf16 %v25, %v25
    %v30 = vld [vmem:[%s1] sm:$0xf]
    %v31 = vld [vmem:[%s1 + $0x4] sm:$0xf]
    %v32 = vld [vmem:[%s1 + $0x8] sm:$0xf]
    %v33 = vld [vmem:[%s1 + $0xc] sm:$0xf]
    %v34 = vld [vmem:[%s1 + $0x10] sm:$0xf]
    %v35 = vld [vmem:[%s1 + $0x14] sm:$0xf]
    %v36 = vld [vmem:[%s1 + $0x18] sm:$0xf]
    %v37 = vld [vmem:[%s1 + $0x1c] sm:$0xf]
    %v38 = vld [vmem:[%s1 + $0x20] sm:$0xf]
    %v39 = vld [vmem:[%s1 + $0x24] sm:$0xf]
    %v40 = vld [vmem:[%s1 + $0x28] sm:$0xf]
    %v41 = vld [vmem:[%s1 + $0x2c] sm:$0xf]
    %v42 = vld [vmem:[%s1 + $0x30] sm:$0xf]
    %v43 = vld [vmem:[%s1 + $0x34] sm:$0xf]
    %v44 = vld [vmem:[%s1 + $0x38] sm:$0xf]
    %v45 = vld [vmem:[%s1 + $0x3c] sm:$0xf]
    %v46 = vld [vmem:[%s1 + $0x40] sm:$0xf]
    %v47 = vld [vmem:[%s1 + $0x44] sm:$0xf]
    %v48 = vld [vmem:[%s1 + $0x48] sm:$0xf]
    %v49 = vld [vmem:[%s1 + $0x4c] sm:$0xf]
    %v50 = vld [vmem:[%s1 + $0x50] sm:$0xf]
    %v51 = vld [vmem:[%s1 + $0x54] sm:$0xf]
    %v52 = vld [vmem:[%s1 + $0x58] sm:$0xf]
    %v53 = vld [vmem:[%s1 + $0x5c] sm:$0xf]
    %v54 = vld [vmem:[%s1 + $0x60] sm:$0xf]
    %v55 = vld [vmem:[%s1 + $0x64] sm:$0xf]
    %v56 = vld [vmem:[%s1 + $0x68] sm:$0xf]
    %v57 = vld [vmem:[%s1 + $0x6c] sm:$0xf]
    %v58 = vld [vmem:[%s1 + $0x70] sm:$0xf]
    %v59 = vld [vmem:[%s1 + $0x74] sm:$0xf]
    %v60 = vld [vmem:[%s1 + $0x78] sm:$0xf]
    %v61 = vld [vmem:[%s1 + $0x7c] sm:$0xf]
    %v62 = vld [vmem:[%s2] sm:$0x1]
    %v64 = vperm.slane %v62, 0
    %v98 = vunpack.c.l.b16 %v30
    %v99 = vunpack.c.l.b16 %v31
    %v100 = vunpack.c.l.b16 %v32
    %v101 = vunpack.c.l.b16 %v33
    %v102 = vunpack.c.l.b16 %v34
    %v103 = vunpack.c.l.b16 %v35
    %v104 = vunpack.c.l.b16 %v36
    %v105 = vunpack.c.l.b16 %v37
    %v106 = vunpack.c.l.b16 %v38
    %v107 = vunpack.c.l.b16 %v39
    %v108 = vunpack.c.l.b16 %v40
    %v109 = vunpack.c.l.b16 %v41
    %v110 = vunpack.c.l.b16 %v42
    %v111 = vunpack.c.l.b16 %v43
    %v112 = vunpack.c.l.b16 %v44
    %v113 = vunpack.c.l.b16 %v45
    %v114 = vunpack.c.l.b16 %v46
    %v115 = vunpack.c.l.b16 %v47
    %v116 = vunpack.c.l.b16 %v48
    %v117 = vunpack.c.l.b16 %v49
    %v118 = vunpack.c.l.b16 %v50
    %v119 = vunpack.c.l.b16 %v51
    %v120 = vunpack.c.l.b16 %v52
    %v121 = vunpack.c.l.b16 %v53
    %v122 = vunpack.c.l.b16 %v54
    %v123 = vunpack.c.l.b16 %v55
    %v124 = vunpack.c.l.b16 %v56
    %v125 = vunpack.c.l.b16 %v57
    %v126 = vunpack.c.l.b16 %v58
    %v127 = vunpack.c.l.b16 %v59
    %v128 = vunpack.c.l.b16 %v60
    %v129 = vunpack.c.l.b16 %v61
    %v130 = vpack.c.b16 %v99, %v98
    %v131 = vpack.c.b16 %v101, %v100
    %v132 = vpack.c.b16 %v103, %v102
    %v133 = vpack.c.b16 %v105, %v104
    %v134 = vpack.c.b16 %v107, %v106
    %v135 = vpack.c.b16 %v109, %v108
    %v136 = vpack.c.b16 %v111, %v110
    %v137 = vpack.c.b16 %v113, %v112
    %v138 = vpack.c.b16 %v115, %v114
    %v139 = vpack.c.b16 %v117, %v116
    %v140 = vpack.c.b16 %v119, %v118
    %v141 = vpack.c.b16 %v121, %v120
    %v142 = vpack.c.b16 %v123, %v122
    %v143 = vpack.c.b16 %v125, %v124
    %v144 = vpack.c.b16 %v127, %v126
    %v145 = vpack.c.b16 %v129, %v128
    %162 = vmatpush.bf16.msra.mxu0 %v137
    %163 = vmatpush.bf16.msra.mxu0 %v136
    %164 = vmatpush.bf16.msra.mxu0 %v135
    %165 = vmatpush.bf16.msra.mxu0 %v134
    %166 = vmatpush.bf16.msra.mxu0 %v133
    %167 = vmatpush.bf16.msra.mxu0 %v132
    %168 = vmatpush.bf16.msra.mxu0 %v131
    %169 = vmatpush.bf16.msra.mxu0 %v130
    %170 = vmatmul.bf16.gmra.mxu0 %v28
    %v171 = vpop.f32.mrf.mxu0
    %v172 = vadd.f32 %v64, %v171
    %v173 = vpop.f32.mrf.mxu0
    %174 = vdwg.mxu0
    %175 = vmatpush.bf16.msra.mxu0 %v145
    %176 = vmatpush.bf16.msra.mxu0 %v144
    %177 = vmatpush.bf16.msra.mxu0 %v143
    %178 = vmatpush.bf16.msra.mxu0 %v142
    %179 = vmatpush.bf16.msra.mxu0 %v141
    %180 = vmatpush.bf16.msra.mxu0 %v140
    %181 = vmatpush.bf16.msra.mxu0 %v139
    %182 = vmatpush.bf16.msra.mxu0 %v138
    %183 = vmatmul.bf16.gmra.mxu0 %v29
    %v184 = vpop.f32.mrf.mxu0
    %v185 = vadd.f32 %v172, %v184
    %v186 = vpop.f32.mrf.mxu0
    %187 = vdwg.mxu0
    %v188 = vmax.f32 %v185, 0.0
    %v189 = vpack.c.bf16 %v188, %v188
    %v190 = vld [vmem:[%s3] sm:$0xf]
    %v191 = vld [vmem:[%s3 + $0x4] sm:$0xf]
    %v192 = vld [vmem:[%s3 + $0x8] sm:$0xf]
    %v193 = vld [vmem:[%s3 + $0xc] sm:$0xf]
    %v194 = vld [vmem:[%s3 + $0x10] sm:$0xf]
    %v195 = vld [vmem:[%s3 + $0x14] sm:$0xf]
    %v196 = vld [vmem:[%s3 + $0x18] sm:$0xf]
    %v197 = vld [vmem:[%s3 + $0x1c] sm:$0xf]
    %v198 = vld [vmem:[%s3 + $0x20] sm:$0xf]
    %v199 = vld [vmem:[%s3 + $0x24] sm:$0xf]
    %v200 = vld [vmem:[%s3 + $0x28] sm:$0xf]
    %v201 = vld [vmem:[%s3 + $0x2c] sm:$0xf]
    %v202 = vld [vmem:[%s3 + $0x30] sm:$0xf]
    %v203 = vld [vmem:[%s3 + $0x34] sm:$0xf]
    %v204 = vld [vmem:[%s3 + $0x38] sm:$0xf]
    %v205 = vld [vmem:[%s3 + $0x3c] sm:$0xf]
    %v206 = vld [vmem:[%s4] sm:$0x1]
    %v208 = vperm.slane %v206, 0
    %v226 = vunpack.c.l.b16 %v190
    %v227 = vunpack.c.l.b16 %v191
    %v228 = vunpack.c.l.b16 %v192
    %v229 = vunpack.c.l.b16 %v193
    %v230 = vunpack.c.l.b16 %v194
    %v231 = vunpack.c.l.b16 %v195
    %v232 = vunpack.c.l.b16 %v196
    %v233 = vunpack.c.l.b16 %v197
    %v234 = vunpack.c.l.b16 %v198
    %v235 = vunpack.c.l.b16 %v199
    %v236 = vunpack.c.l.b16 %v200
    %v237 = vunpack.c.l.b16 %v201
    %v238 = vunpack.c.l.b16 %v202
    %v239 = vunpack.c.l.b16 %v203
    %v240 = vunpack.c.l.b16 %v204
    %v241 = vunpack.c.l.b16 %v205
    %v242 = vpack.c.b16 %v227, %v226
    %v243 = vpack.c.b16 %v229, %v228
    %v244 = vpack.c.b16 %v231, %v230
    %v245 = vpack.c.b16 %v233, %v232
    %v246 = vpack.c.b16 %v235, %v234
    %v247 = vpack.c.b16 %v237, %v236
    %v248 = vpack.c.b16 %v239, %v238
    %v249 = vpack.c.b16 %v241, %v240
    %258 = vmatpush.bf16.msra.mxu0 %v249
    %259 = vmatpush.bf16.msra.mxu0 %v248
    %260 = vmatpush.bf16.msra.mxu0 %v247
    %261 = vmatpush.bf16.msra.mxu0 %v246
    %262 = vmatpush.bf16.msra.mxu0 %v245
    %263 = vmatpush.bf16.msra.mxu0 %v244
    %264 = vmatpush.bf16.msra.mxu0 %v243
    %265 = vmatpush.bf16.msra.mxu0 %v242
    %266 = vmatmul.bf16.gmra.mxu0 %v189
    %v267 = vpop.f32.mrf.mxu0
    %v268 = vadd.f32 %v208, %v267
    %v269 = vpop.f32.mrf.mxu0
    %270 = vdwg.mxu0
    %vm271 = vcmask 1041408
    %v272 = vsel %vm271, %v268, -inf
    %273 = vmax.xlane.f32.xlu0 %v272
    %v274 = vpop.xlane.xlu0 %273
    %v275 = vsub.f32 %v268, %v274
    %v276 = vmul.f32 %v275, 1.442695
    %v277 = vpow.pop %v276
    %v278 = vsel %vm271, %v277, 0.0
    %279 = vadd.xlane.f32.xlu0 %v278
    %v280 = vpop.xlane.xlu0 %279
    %v281 = vrcp.pop %v280
    %v282 = vmul.f32 %v280, %v281
    %v283 = vsub.f32 1.0, %v282
    %v284 = vmul.f32 %v281, %v283
    %v285 = vadd.f32 %v281, %v284
    %vm286 = vweird.f32 %v280
    %vm287 = vweird.f32 %v281
    %vm288 = vmor %vm286, %vm287
    %v289 = vsel %vm288, %v281, %v285
    %v290 = vand.u32 2147483647, %v280
    %vm291 = vcmp.eq.f32.partialorder %v290, 8.507059e+37
    %v292 = vand.u32 %v280, 2147483648
    %v293 = vor.u32 1.1754944e-38, %v292
    %v294 = vsel %vm291, %v293, %v289
    %v295 = vmul.f32 %v277, %v294
    %296 = vst [vmem:[#allocation2] sm:$0x3] %v295
    // Predicated region
    $region22: #{segment_classifier.1} parent=1 // pred_check
      _
    $region23: #{segment_classifier.1} parent=1 // pred_check_branch
      %298 = sbr.rel (0) target = $region25
    $region24: #{segment_classifier.1} parent=1 // pred_region
      %300 = vsyncadd [#allocation3], 0
      %s302 = sshll.u32 [#allocation2], 4
      %s303 = int_to_ptr.vmem [resolvable:$true] %s302
      %s304 = sshll.u32 %s5, 4
      %s305 = int_to_ptr.hbm [resolvable:$true] %s304
      %307 = dma.vmem_to_hbm [thread:$0]  %s303, 32, %s305, [#allocation3]
    $region25: #{segment_classifier.1} parent=1 // pred_fallthru
      _
    // Predicated region
    $region26: #{segment_classifier.1} parent=1 // pred_check
      _
    $region27: #{segment_classifier.1} parent=1 // pred_check_branch
      %309 = sbr.rel (0) target = $region29
    $region28: #{segment_classifier.1} parent=1 // pred_region
      %311 = dma.done [#allocation3], 32
    $region29: #{segment_classifier.1} parent=1 // pred_fallthru
      _
    %312 = vsyncpa [#allocation3], 1

</llo_original>
